<compile_context>
chip_gen: v7x
topology: tpu7x:2x2x1
jax: 0.10.0
libtpu: 0.0.40
codegen_flags: <defaults>
</compile_context>

<pallas_src>
import functools

import jax
import jax.numpy as jnp
from jax.experimental import pallas as pl
from jax.experimental.pallas import tpu as pltpu

_LANE = 128


def _round_up(x, m):
    return ((x + m - 1) // m) * m


def _pad2d(x, rows, cols, dtype):
    """Zero-pad a 2-D array to (rows, cols) and cast to dtype (single pass)."""
    if x.shape == (rows, cols):
        return x.astype(dtype)
    out = jnp.zeros((rows, cols), dtype=dtype)
    return out.at[: x.shape[0], : x.shape[1]].set(x.astype(dtype))


# ---------------- kernels ----------------

def _xw1_kernel(x_ref, w1t_ref, xw1_ref):
    """Stage 0: XW1 = X @ W1.T (row-tiled over X)."""
    xw1 = jnp.dot(x_ref[...], w1t_ref[...], preferred_element_type=jnp.float32)
    xw1_ref[...] = xw1.astype(xw1_ref.dtype)


def _layer1_kernel(a_ref, xw1_ref, w2t_ref, p_ref, acc_ref, *, mxu_dtype):
    """Stage 1: P = relu(A @ XW1) @ W2.T, K-tiled over A's columns."""
    k = pl.program_id(1)

    @pl.when(k == 0)
    def _():
        acc_ref[...] = jnp.zeros_like(acc_ref)

    a = a_ref[...].astype(mxu_dtype)  # int8 0/1 -> exact upcast on the VPU
    acc_ref[...] += jnp.dot(a, xw1_ref[...], preferred_element_type=jnp.float32)

    @pl.when(k == pl.num_programs(1) - 1)
    def _():
        z2 = jnp.maximum(acc_ref[...], 0.0)  # ReLU on the f32 accumulator
        p = jnp.dot(z2.astype(mxu_dtype), w2t_ref[...],
                    preferred_element_type=jnp.float32)
        p_ref[...] = p.astype(p_ref.dtype)


def _layer2_kernel(a_ref, p_ref, o_ref, *, mxu_dtype):
    """Stage 2: Out = A @ P, K-tiled over A's columns, accumulate in o_ref (f32)."""
    k = pl.program_id(1)
    a = a_ref[...].astype(mxu_dtype)
    contrib = jnp.dot(a, p_ref[...].astype(mxu_dtype),
                      preferred_element_type=jnp.float32)

    @pl.when(k == 0)
    def _():
        o_ref[...] = contrib

    @pl.when(k > 0)
    def _():
        o_ref[...] += contrib


# ---------------- wrapper ----------------

def gcn_without_norm(A, X, W1, W2, *, compute_dtype=jnp.bfloat16,
                     row_tile=256, k_tile=1024, a_dtype=jnp.int8):
    """A: [N,N], X: [N,in], W1: [hidden,in], W2: [out,hidden] (PyTorch Linear layout)."""
    N = A.shape[0]
    in_size = X.shape[1]
    hidden_size = W1.shape[0]
    out_size = W2.shape[0]

    # Pad N only to the layout requirement (128 lanes), then round to the
    # chosen K tile (which is itself clamped to the padded size).  No
    # quadratic blow-up for small graphs.
    n128 = _round_up(N, _LANE)
    tk = min(k_tile, n128)
    n_pad = _round_up(n128, tk)

    # Row tile: prefer 256, but guarantee >=2 strips on the "parallel" axis
    # whenever possible so v7x's two TensorCores both get work.
    if n_pad >= 512 and n_pad % 256 == 0:
        tm = min(row_tile, 256)
    elif n_pad >= 256:
        tm = 128
    else:
        tm = n_pad  # tiny graph: a single 128-row strip

    in_pad = _round_up(in_size, _LANE)
    h_pad = _round_up(hidden_size, _LANE)
    out_pad = _round_up(out_size, _LANE)

    # A stored in 8 bits (0/1 adjacency -> exact), upcast in-kernel.
    a_p = _pad2d(A, n_pad, n_pad, a_dtype)
    x_p = _pad2d(X, n_pad, in_pad, compute_dtype)
    w1t_p = _pad2d(W1.T, in_pad, h_pad, compute_dtype)   # [in, hidden]
    w2t_p = _pad2d(W2.T, h_pad, out_pad, compute_dtype)  # [hidden, out]

    n_rows = n_pad // tm
    n_k = n_pad // tk
    vmem_limit = 48 * 1024 * 1024  # below v7x's 64 MiB physical VMEM

    cparams_1d = pltpu.CompilerParams(
        dimension_semantics=("parallel",), vmem_limit_bytes=vmem_limit)
    cparams_2d = pltpu.CompilerParams(
        dimension_semantics=("parallel", "arbitrary"),
        vmem_limit_bytes=vmem_limit)

    # Stage 0: XW1 = X @ W1.T  (computed once, hoisted out of the A passes).
    xw1 = pl.pallas_call(
        _xw1_kernel,
        out_shape=jax.ShapeDtypeStruct((n_pad, h_pad), compute_dtype),
        grid=(n_rows,),
        in_specs=[pl.BlockSpec((tm, in_pad), lambda i: (i, 0)),
                  pl.BlockSpec((in_pad, h_pad), lambda i: (0, 0))],
        out_specs=pl.BlockSpec((tm, h_pad), lambda i: (i, 0)),
        compiler_params=cparams_1d,
    )(x_p, w1t_p)

    # Stage 1: P = relu(A @ XW1) @ W2.T  (row x K tiled, f32 VMEM accumulator).
    p = pl.pallas_call(
        functools.partial(_layer1_kernel, mxu_dtype=compute_dtype),
        out_shape=jax.ShapeDtypeStruct((n_pad, out_pad), jnp.float32),
        grid=(n_rows, n_k),
        in_specs=[pl.BlockSpec((tm, tk), lambda i, k: (i, k)),
                  pl.BlockSpec((tk, h_pad), lambda i, k: (k, 0)),
                  pl.BlockSpec((h_pad, out_pad), lambda i, k: (0, 0))],
        out_specs=pl.BlockSpec((tm, out_pad), lambda i, k: (i, 0)),
        scratch_shapes=[pltpu.VMEM((tm, h_pad), jnp.float32)],
        compiler_params=cparams_2d,
    )(a_p, xw1, w2t_p)

    # Stage 2: Out = A @ P  (row x K tiled, accumulate directly in the f32 output).
    out = pl.pallas_call(
        functools.partial(_layer2_kernel, mxu_dtype=compute_dtype),
        out_shape=jax.ShapeDtypeStruct((n_pad, out_pad), jnp.float32),
        grid=(n_rows, n_k),
        in_specs=[pl.BlockSpec((tm, tk), lambda i, k: (i, k)),
                  pl.BlockSpec((tk, out_pad), lambda i, k: (k, 0))],
        out_specs=pl.BlockSpec((tm, out_pad), lambda i, k: (i, 0)),
        compiler_params=cparams_2d,
    )(a_p, p)

    return out[:N, :out_size]


def gcn_without_norm_ref(A, X, W1, W2):
    z1 = A @ (X @ W1.T)
    z2 = jnp.maximum(z1, 0.0)
    return A @ (z2 @ W2.T)


if __name__ == "__main__":
    # Small shapes consistent with the module: N nodes, in features,
    # hidden_size=16, out_size classes.
    N, in_size, hidden_size, out_size = 8, 32, 16, 4

    key = jax.random.PRNGKey(0)
    k_a, k_x, k_w1, k_w2 = jax.random.split(key, 4)

    A = (jax.random.uniform(k_a, (N, N)) > 0.5).astype(jnp.float32)
    X = jax.random.normal(k_x, (N, in_size), dtype=jnp.float32)
    # nn.Linear(in, hidden, bias=False) -> weight [hidden, in]
    W1 = jax.random.normal(k_w1, (hidden_size, in_size), dtype=jnp.float32) * 0.1
    # nn.Linear(hidden, out, bias=False) -> weight [out, hidden]
    W2 = jax.random.normal(k_w2, (out_size, hidden_size), dtype=jnp.float32) * 0.1

    ref = gcn_without_norm_ref(A, X, W1, W2)

    # Tight check of tiling / padding / K-accumulation with the f32 compute path.
    out_f32 = jax.block_until_ready(
        gcn_without_norm(A, X, W1, W2, compute_dtype=jnp.float32))
    assert out_f32.shape == (N, out_size)
    assert jnp.allclose(out_f32, ref, atol=1e-4, rtol=1e-4), "f32 path mismatch"

    # Default bf16 fast path: A (0/1) stored int8 is exact; activations lose
    # ~1e-3 rel, so compare with a relaxed tolerance.
    out_bf16 = jax.block_until_ready(gcn_without_norm(A, X, W1, W2))
    assert out_bf16.shape == (N, out_size)
    assert jnp.allclose(out_bf16, ref, atol=5e-2, rtol=5e-2), "bf16 path mismatch"

    print("KERNEL_OK")
</pallas_src>

<mosaic_0001>
module attributes {stable_mosaic.version = 11 : i64} {
  func.func @_xw1_kernel(%arg0: i32, %arg1: memref<128x128xf32, #tpu.memory_space<vmem>>, %arg2: memref<128x128xf32, #tpu.memory_space<vmem>>, %arg3: memref<128x128xf32, #tpu.memory_space<vmem>>) attributes {dimension_semantics = [#tpu.dimension_semantics<parallel>], iteration_bounds = array<i64: 1>, scalar_prefetch = 0 : i64, scratch_operands = 0 : i64, tpu.core_type = #tpu.core_type<tc>, window_params = [{transform_indices = @transform_0, window_bounds = array<i64: 128, 128>}, {pipeline_mode = #tpu.pipeline_mode<synchronous>, transform_indices = @transform_1, window_bounds = array<i64: 128, 128>}, {transform_indices = @transform_2, window_bounds = array<i64: 128, 128>}]} {
    %c0 = arith.constant 0 : index
    %c0_0 = arith.constant 0 : index
    %0 = vector.load %arg1[%c0, %c0_0] : memref<128x128xf32, #tpu.memory_space<vmem>>, vector<128x128xf32>
    %c0_1 = arith.constant 0 : index
    %c0_2 = arith.constant 0 : index
    %1 = vector.load %arg2[%c0_1, %c0_2] : memref<128x128xf32, #tpu.memory_space<vmem>>, vector<128x128xf32>
    %cst = arith.constant dense<0.000000e+00> : vector<128x128xf32>
    %2 = tpu.matmul %0, %1, %cst {dimension_numbers = #tpu.dot_dimension_numbers<[1], [0], [0], [1], [0, 0, 1, 1], [], []>} : vector<128x128xf32>, vector<128x128xf32>, vector<128x128xf32> -> vector<128x128xf32>
    %c0_3 = arith.constant 0 : index
    %c0_4 = arith.constant 0 : index
    %3 = vector.load %arg3[%c0_3, %c0_4] : memref<128x128xf32, #tpu.memory_space<vmem>>, vector<128x128xf32>
    tpu.vector_store %arg3[%c0_3, %c0_4], %2 {strides = array<i32>} : memref<128x128xf32, #tpu.memory_space<vmem>>, vector<128x128xf32>,
    return
  }
  func.func @transform_0(%arg0: i32) -> (i32, i32) {
    %c0_i32 = arith.constant 0 : i32
    %c0_i32_0 = arith.constant 0 : i32
    return %arg0, %c0_i32 : i32, i32
  }
  func.func @transform_1(%arg0: i32) -> (i32, i32) {
    %c0_i32 = arith.constant 0 : i32
    %c0_i32_0 = arith.constant 0 : i32
    %c0_i32_1 = arith.constant 0 : i32
    return %c0_i32, %c0_i32_0 : i32, i32
  }
  func.func @transform_2(%arg0: i32) -> (i32, i32) {
    %c0_i32 = arith.constant 0 : i32
    %c0_i32_0 = arith.constant 0 : i32
    return %arg0, %c0_i32 : i32, i32
  }
}

</mosaic_0001>

<llo_original>
// kernel: tpu_custom_call.1
$region0: #{tpu_custom_call.1}
  #allocation0 [shape = 'u32[]', space=smem, size = 0x4, offset = 0x4, fixed_abs, tag = 'smem constant byte address 0x4 - core index']
  #allocation1 [shape = 'u32[144,128]{1,0:T(1,128)}', space=vmem, size = 0x12000, scoped, tag = 'internal scratch']
  %s0 = inlined_call_operand.hbm [shape: f32[128,128], index: 0, kind: input, shape index: {}]
  %s1 = inlined_call_operand.hbm [shape: f32[128,128], index: 1, kind: input, shape index: {}]
  %s2 = inlined_call_operand.hbm [shape: f32[128,128], index: 2, kind: output, shape index: {}]
  %s3 = sld [smem:[#allocation0]]
  $region26: #{tpu_custom_call.1} parent=0
    _
  %s5 = ssub.s32 1, %s3
  %s6 = scalar_select 0, %s5, %s3
  $region1: #{tpu_custom_call.1} parent=0
    #allocation2 [shape = 'u8[65536]{0}', space=vmem, size = 0x10000, scoped, tag = 'input window, operand 0, single buffered']
    #allocation3 [shape = 's32[1]{0}', space=sflag, size = 0x4, scoped, tag = 'scoped memory for tpu_custom_call.1']
    #allocation4 [shape = 's32[1]{0}', space=sflag, size = 0x4, scoped, tag = 'scoped memory for tpu_custom_call.1']
    #allocation5 [shape = 'u8[65536]{0}', space=vmem, size = 0x10000, scoped, tag = 'input window, operand 1, single buffered']
    #allocation6 [shape = 's32[1]{0}', space=sflag, size = 0x4, scoped, tag = 'scoped memory for tpu_custom_call.1']
    #allocation7 [shape = 'u8[65536]{0}', space=vmem, size = 0x10000, scoped, tag = 'output window, operand 0, single buffered']
    %7 = vsyncpa [#allocation3], 0
    %8 = vsyncpa [#allocation6], 0
    %9 = vsyncpa [#allocation4], 0
    // Predicated region
    $region2: #{tpu_custom_call.1} parent=1 // pred_check
      _
    $region3: #{tpu_custom_call.1} parent=1 // pred_check_branch
      %11 = sbr.rel (0) target = $region5
    $region4: #{tpu_custom_call.1} parent=1 // pred_region
      %s13 = ssub.s32 2048, 2048
      %14 = vsyncadd [#allocation3], %s13
      %s15 = sshll.u32 [#allocation2], 4
      %s16 = int_to_ptr.vmem [resolvable:$true] %s15
      %21 = dma.hbm_to_vmem [thread:$0]  %s0, 2048, %s16, [#allocation3], 128, 128, 8
    $region5: #{tpu_custom_call.1} parent=1 // pred_fallthru
      _
    // Predicated region
    $region6: #{tpu_custom_call.1} parent=1 // pred_check
      _
    $region7: #{tpu_custom_call.1} parent=1 // pred_check_branch
      %23 = sbr.rel (0) target = $region9
    $region8: #{tpu_custom_call.1} parent=1 // pred_region
      %s25 = ssub.s32 2048, 2048
      %26 = vsyncadd [#allocation6], %s25
      %s27 = sshll.u32 [#allocation5], 4
      %s28 = int_to_ptr.vmem [resolvable:$true] %s27
      %33 = dma.hbm_to_vmem [thread:$0]  %s1, 2048, %s28, [#allocation6], 128, 128, 8
    $region9: #{tpu_custom_call.1} parent=1 // pred_fallthru
      _
    // Predicated region
    $region10: #{tpu_custom_call.1} parent=1 // pred_check
      _
    $region11: #{tpu_custom_call.1} parent=1 // pred_check_branch
      %35 = sbr.rel (0) target = $region13
    $region12: #{tpu_custom_call.1} parent=1 // pred_region
      %36 = dma.done [#allocation3], 2048
    $region13: #{tpu_custom_call.1} parent=1 // pred_fallthru
      _
    // Predicated region
    $region14: #{tpu_custom_call.1} parent=1 // pred_check
      _
    $region15: #{tpu_custom_call.1} parent=1 // pred_check_branch
      %38 = sbr.rel (0) target = $region17
    $region16: #{tpu_custom_call.1} parent=1 // pred_region
      %39 = dma.done [#allocation6], 2048
    $region17: #{tpu_custom_call.1} parent=1 // pred_fallthru
      _
    %v40 = vld [vmem:[#allocation2] sm:$0xff]
    %v41 = vld [vmem:[#allocation2 + $0x8] sm:$0xff]
    %v42 = vld [vmem:[#allocation2 + $0x10] sm:$0xff]
    %v43 = vld [vmem:[#allocation2 + $0x18] sm:$0xff]
    %v44 = vld [vmem:[#allocation2 + $0x20] sm:$0xff]
    %v45 = vld [vmem:[#allocation2 + $0x28] sm:$0xff]
    %v46 = vld [vmem:[#allocation2 + $0x30] sm:$0xff]
    %v47 = vld [vmem:[#allocation2 + $0x38] sm:$0xff]
    %v48 = vld [vmem:[#allocation2 + $0x40] sm:$0xff]
    %v49 = vld [vmem:[#allocation2 + $0x48] sm:$0xff]
    %v50 = vld [vmem:[#allocation2 + $0x50] sm:$0xff]
    %v51 = vld [vmem:[#allocation2 + $0x58] sm:$0xff]
    %v52 = vld [vmem:[#allocation2 + $0x60] sm:$0xff]
    %v53 = vld [vmem:[#allocation2 + $0x68] sm:$0xff]
    %v54 = vld [vmem:[#allocation2 + $0x70] sm:$0xff]
    %v55 = vld [vmem:[#allocation2 + $0x78] sm:$0xff]
    %v56 = vld [vmem:[#allocation5] sm:$0xff]
    %v57 = vld [vmem:[#allocation5 + $0x8] sm:$0xff]
    %v58 = vld [vmem:[#allocation5 + $0x10] sm:$0xff]
    %v59 = vld [vmem:[#allocation5 + $0x18] sm:$0xff]
    %v60 = vld [vmem:[#allocation5 + $0x20] sm:$0xff]
    %v61 = vld [vmem:[#allocation5 + $0x28] sm:$0xff]
    %v62 = vld [vmem:[#allocation5 + $0x30] sm:$0xff]
    %v63 = vld [vmem:[#allocation5 + $0x38] sm:$0xff]
    %v64 = vld [vmem:[#allocation5 + $0x40] sm:$0xff]
    %v65 = vld [vmem:[#allocation5 + $0x48] sm:$0xff]
    %v66 = vld [vmem:[#allocation5 + $0x50] sm:$0xff]
    %v67 = vld [vmem:[#allocation5 + $0x58] sm:$0xff]
    %v68 = vld [vmem:[#allocation5 + $0x60] sm:$0xff]
    %v69 = vld [vmem:[#allocation5 + $0x68] sm:$0xff]
    %v70 = vld [vmem:[#allocation5 + $0x70] sm:$0xff]
    %v71 = vld [vmem:[#allocation5 + $0x78] sm:$0xff]
    %72 = vmatprep.subr.mxu0 0.0
    %73 = vmatpush1.msra.mxu0 %v56
    %74 = vmatprep.subr.mxu0 0.0
    %75 = vmatpush1.msra.mxu0 %v57
    %76 = vmatprep.subr.mxu0 0.0
    %77 = vmatpush1.msra.mxu0 %v58
    %78 = vmatprep.subr.mxu0 0.0
    %79 = vmatpush1.msra.mxu0 %v59
    %80 = vmatprep.subr.mxu0 0.0
    %81 = vmatpush1.msra.mxu0 %v60
    %82 = vmatprep.subr.mxu0 0.0
    %83 = vmatpush1.msra.mxu0 %v61
    %84 = vmatprep.subr.mxu0 0.0
    %85 = vmatpush1.msra.mxu0 %v62
    %86 = vmatprep.subr.mxu0 0.0
    %87 = vmatpush1.msra.mxu0 %v63
    %88 = vmatprep.subr.mxu0 0.0
    %89 = vmatpush1.msra.mxu0 %v64
    %90 = vmatprep.subr.mxu0 0.0
    %91 = vmatpush1.msra.mxu0 %v65
    %92 = vmatprep.subr.mxu0 0.0
    %93 = vmatpush1.msra.mxu0 %v66
    %94 = vmatprep.subr.mxu0 0.0
    %95 = vmatpush1.msra.mxu0 %v67
    %96 = vmatprep.subr.mxu0 0.0
    %97 = vmatpush1.msra.mxu0 %v68
    %98 = vmatprep.subr.mxu0 0.0
    %99 = vmatpush1.msra.mxu0 %v69
    %100 = vmatprep.subr.mxu0 0.0
    %101 = vmatpush1.msra.mxu0 %v70
    %102 = vmatprep.subr.mxu0 0.0
    %103 = vmatpush1.msra.mxu0 %v71
    %104 = vmatprep.subr.mxu0 0.0
    %105 = vmatpush1.msra.mxu0 0.0
    %106 = vmatprep.subr.mxu0 0.0
    %107 = vmatpush1.msra.mxu0 0.0
    %108 = vmatprep.subr.mxu0 0.0
    %109 = vmatpush1.msra.mxu0 0.0
    %110 = vmatprep.subr.mxu0 0.0
    %111 = vmatpush1.msra.mxu0 0.0
    %112 = vmatprep.subr.mxu0 0.0
    %113 = vmatpush1.msra.mxu0 0.0
    %114 = vmatprep.subr.mxu0 0.0
    %115 = vmatpush1.msra.mxu0 0.0
    %116 = vmatprep.subr.mxu0 0.0
    %117 = vmatpush1.msra.mxu0 0.0
    %118 = vmatprep.subr.mxu0 0.0
    %119 = vmatpush1.msra.mxu0 0.0
    %120 = vmatprep.subr.mxu0 0.0
    %121 = vmatpush1.msra.mxu0 0.0
    %122 = vmatprep.subr.mxu0 0.0
    %123 = vmatpush1.msra.mxu0 0.0
    %124 = vmatprep.subr.mxu0 0.0
    %125 = vmatpush1.msra.mxu0 0.0
    %126 = vmatprep.subr.mxu0 0.0
    %127 = vmatpush1.msra.mxu0 0.0
    %128 = vmatprep.subr.mxu0 0.0
    %129 = vmatpush1.msra.mxu0 0.0
    %130 = vmatprep.subr.mxu0 0.0
    %131 = vmatpush1.msra.mxu0 0.0
    %132 = vmatprep.subr.mxu0 0.0
    %133 = vmatpush1.msra.mxu0 0.0
    %134 = vmatprep.subr.mxu0 0.0
    %135 = vmatpush1.msra.mxu0 0.0
    %136 = vmatprep.mubr.f32.mxu0 0.0
    %137 = vmatmul.mubr.f32.gmra.mrb[0].mxu0 %v40
    %v138 = vpop.f32.mrb[0].mxu0
    %v139 = vadd.f32 0.0, %v138
    %v140 = vpop.f32.mrb[0].mxu0
    %141 = vmatprep.mubr.f32.mxu0 0.0
    %142 = vmatmul.mubr.f32.gmra.mrb[0].mxu0 %v41
    %v143 = vpop.f32.mrb[0].mxu0
    %v144 = vadd.f32 0.0, %v143
    %v145 = vpop.f32.mrb[0].mxu0
    %146 = vmatprep.mubr.f32.mxu0 0.0
    %147 = vmatmul.mubr.f32.gmra.mrb[0].mxu0 %v42
    %v148 = vpop.f32.mrb[0].mxu0
    %v149 = vadd.f32 0.0, %v148
    %v150 = vpop.f32.mrb[0].mxu0
    %151 = vmatprep.mubr.f32.mxu0 0.0
    %152 = vmatmul.mubr.f32.gmra.mrb[0].mxu0 %v43
    %v153 = vpop.f32.mrb[0].mxu0
    %v154 = vadd.f32 0.0, %v153
    %v155 = vpop.f32.mrb[0].mxu0
    %156 = vmatprep.mubr.f32.mxu0 0.0
    %157 = vmatmul.mubr.f32.gmra.mrb[0].mxu0 %v44
    %v158 = vpop.f32.mrb[0].mxu0
    %v159 = vadd.f32 0.0, %v158
    %v160 = vpop.f32.mrb[0].mxu0
    %161 = vmatprep.mubr.f32.mxu0 0.0
    %162 = vmatmul.mubr.f32.gmra.mrb[0].mxu0 %v45
    %v163 = vpop.f32.mrb[0].mxu0
    %v164 = vadd.f32 0.0, %v163
    %v165 = vpop.f32.mrb[0].mxu0
    %166 = vmatprep.mubr.f32.mxu0 0.0
    %167 = vmatmul.mubr.f32.gmra.mrb[0].mxu0 %v46
    %v168 = vpop.f32.mrb[0].mxu0
    %v169 = vadd.f32 0.0, %v168
    %v170 = vpop.f32.mrb[0].mxu0
    %171 = vmatprep.mubr.f32.mxu0 0.0
    %172 = vmatmul.mubr.f32.gmra.mrb[0].mxu0 %v47
    %v173 = vpop.f32.mrb[0].mxu0
    %v174 = vadd.f32 0.0, %v173
    %v175 = vpop.f32.mrb[0].mxu0
    %176 = vmatprep.mubr.f32.mxu0 0.0
    %177 = vmatmul.mubr.f32.gmra.mrb[0].mxu0 %v48
    %v178 = vpop.f32.mrb[0].mxu0
    %v179 = vadd.f32 0.0, %v178
    %v180 = vpop.f32.mrb[0].mxu0
    %181 = vmatprep.mubr.f32.mxu0 0.0
    %182 = vmatmul.mubr.f32.gmra.mrb[0].mxu0 %v49
    %v183 = vpop.f32.mrb[0].mxu0
    %v184 = vadd.f32 0.0, %v183
    %v185 = vpop.f32.mrb[0].mxu0
    %186 = vmatprep.mubr.f32.mxu0 0.0
    %187 = vmatmul.mubr.f32.gmra.mrb[0].mxu0 %v50
    %v188 = vpop.f32.mrb[0].mxu0
    %v189 = vadd.f32 0.0, %v188
    %v190 = vpop.f32.mrb[0].mxu0
    %191 = vmatprep.mubr.f32.mxu0 0.0
    %192 = vmatmul.mubr.f32.gmra.mrb[0].mxu0 %v51
    %v193 = vpop.f32.mrb[0].mxu0
    %v194 = vadd.f32 0.0, %v193
    %v195 = vpop.f32.mrb[0].mxu0
    %196 = vmatprep.mubr.f32.mxu0 0.0
    %197 = vmatmul.mubr.f32.gmra.mrb[0].mxu0 %v52
    %v198 = vpop.f32.mrb[0].mxu0
    %v199 = vadd.f32 0.0, %v198
    %v200 = vpop.f32.mrb[0].mxu0
    %201 = vmatprep.mubr.f32.mxu0 0.0
    %202 = vmatmul.mubr.f32.gmra.mrb[0].mxu0 %v53
    %v203 = vpop.f32.mrb[0].mxu0
    %v204 = vadd.f32 0.0, %v203
    %v205 = vpop.f32.mrb[0].mxu0
    %206 = vmatprep.mubr.f32.mxu0 0.0
    %207 = vmatmul.mubr.f32.gmra.mrb[0].mxu0 %v54
    %v208 = vpop.f32.mrb[0].mxu0
    %v209 = vadd.f32 0.0, %v208
    %v210 = vpop.f32.mrb[0].mxu0
    %211 = vmatprep.mubr.f32.mxu0 0.0
    %212 = vmatmul.mubr.f32.gmra.mrb[0].mxu0 %v55
    %v213 = vpop.f32.mrb[0].mxu0
    %v214 = vadd.f32 0.0, %v213
    %v215 = vpop.f32.mrb[0].mxu0
    %216 = vdwg.mxu0
    %217 = vst [vmem:[#allocation7] sm:$0xff] %v139
    %218 = vst [vmem:[#allocation7 + $0x8] sm:$0xff] %v144
    %219 = vst [vmem:[#allocation7 + $0x10] sm:$0xff] %v149
    %220 = vst [vmem:[#allocation7 + $0x18] sm:$0xff] %v154
    %221 = vst [vmem:[#allocation7 + $0x20] sm:$0xff] %v159
    %222 = vst [vmem:[#allocation7 + $0x28] sm:$0xff] %v164
    %223 = vst [vmem:[#allocation7 + $0x30] sm:$0xff] %v169
    %224 = vst [vmem:[#allocation7 + $0x38] sm:$0xff] %v174
    %225 = vst [vmem:[#allocation7 + $0x40] sm:$0xff] %v179
    %226 = vst [vmem:[#allocation7 + $0x48] sm:$0xff] %v184
    %227 = vst [vmem:[#allocation7 + $0x50] sm:$0xff] %v189
    %228 = vst [vmem:[#allocation7 + $0x58] sm:$0xff] %v194
    %229 = vst [vmem:[#allocation7 + $0x60] sm:$0xff] %v199
    %230 = vst [vmem:[#allocation7 + $0x68] sm:$0xff] %v204
    %231 = vst [vmem:[#allocation7 + $0x70] sm:$0xff] %v209
    %232 = vst [vmem:[#allocation7 + $0x78] sm:$0xff] %v214
    // Predicated region
    $region18: #{tpu_custom_call.1} parent=1 // pred_check
      _
    $region19: #{tpu_custom_call.1} parent=1 // pred_check_branch
      %234 = sbr.rel (0) target = $region21
    $region20: #{tpu_custom_call.1} parent=1 // pred_region
      %s236 = ssub.s32 2048, 2048
      %237 = vsyncadd [#allocation4], %s236
      %s238 = sshll.u32 [#allocation7], 4
      %s239 = int_to_ptr.vmem [resolvable:$true] %s238
      %244 = dma.vmem_to_hbm [thread:$0]  %s239, 2048, %s2, [#allocation4], 128, 128, 8
    $region21: #{tpu_custom_call.1} parent=1 // pred_fallthru
      _
    // Predicated region
    $region22: #{tpu_custom_call.1} parent=1 // pred_check
      _
    $region23: #{tpu_custom_call.1} parent=1 // pred_check_branch
      %246 = sbr.rel (0) target = $region25
    $region24: #{tpu_custom_call.1} parent=1 // pred_region
      %247 = dma.done [#allocation4], 2048
    $region25: #{tpu_custom_call.1} parent=1 // pred_fallthru
      _
    %248 = vsyncpa [#allocation3], 1
    %249 = vsyncpa [#allocation6], 1
    %250 = vsyncpa [#allocation4], 1

</llo_original>
